<compile_context>
chip_gen: v7x
topology: tpu7x:2x2x1
jax: 0.10.0
libtpu: 0.0.40
codegen_flags: <defaults>
</compile_context>

<pallas_src>
import jax
import jax.numpy as jnp
from jax.experimental import pallas as pl
from jax.experimental.pallas import tpu as pltpu

NUM_USERS = 4
POWER_LEVELS = 5
IN_DIM = NUM_USERS * NUM_USERS   # 16
H1 = 128
H2 = 64
BN_EPS = 1e-5
LANES = 128

# ---- row layout of the single packed parameter slab (all offsets % 8 == 0) --
_ROW_W1 = 0                      # rows   0..15  : w1  (16, 128)
_ROW_W2 = _ROW_W1 + IN_DIM       # rows  16..143 : w2  (128, 64)  in lanes 0..63
_ROW_W3 = _ROW_W2 + H1           # rows 144..207 : w3  (64, 5)    in lanes 0..4
_ROW_VEC = _ROW_W3 + H2          # rows 208..215 : bias / BN vectors
_VEC_B1, _VEC_G1, _VEC_BETA1 = 0, 1, 2
_VEC_B2, _VEC_G2, _VEC_BETA2 = 3, 4, 5
_VEC_B3 = 6
_N_ROWS = _ROW_VEC + 8           # 216 rows -> 216*128*4 B ~= 108 KiB


def _bn_train(h, gamma, beta):
    """Training-mode BatchNorm1d: whole-batch mean + biased variance.

    Two-pass (centered) variance for numerical robustness; gamma/invstd and
    beta are folded so the normalization is a single mul+add over the tensor.
    """
    inv_b = 1.0 / h.shape[0]
    mu = jnp.sum(h, axis=0, keepdims=True) * inv_b
    d = h - mu
    var = jnp.sum(d * d, axis=0, keepdims=True) * inv_b
    scale = gamma * jax.lax.rsqrt(var + BN_EPS)
    return d * scale + beta


def _network_kernel(x_ref, p_ref, out_ref):
    x = x_ref[...]                                              # (B, 16)

    # Static, 8-aligned row slices of the packed slab (full 128 lanes loaded,
    # narrower lane ranges sliced on the loaded value).
    w1 = p_ref[_ROW_W1:_ROW_W1 + IN_DIM, :]                     # (16, 128)
    w2 = p_ref[_ROW_W2:_ROW_W2 + H1, :][:, :H2]                 # (128, 64)
    w3 = p_ref[_ROW_W3:_ROW_W3 + H2, :][:, :POWER_LEVELS]       # (64, 5)
    vec = p_ref[_ROW_VEC:_ROW_VEC + 8, :]                       # (8, 128), one vreg

    b1    = vec[_VEC_B1:_VEC_B1 + 1, :H1]
    g1    = vec[_VEC_G1:_VEC_G1 + 1, :H1]
    beta1 = vec[_VEC_BETA1:_VEC_BETA1 + 1, :H1]
    b2    = vec[_VEC_B2:_VEC_B2 + 1, :H2]
    g2    = vec[_VEC_G2:_VEC_G2 + 1, :H2]
    beta2 = vec[_VEC_BETA2:_VEC_BETA2 + 1, :H2]
    b3    = vec[_VEC_B3:_VEC_B3 + 1, :POWER_LEVELS]

    # ---- fc1 + ReLU + BN1 (training-mode batch stats) ------------------------
    h = jnp.dot(x, w1, preferred_element_type=jnp.float32) + b1
    h = jnp.maximum(h, 0.0)                                     # (B, 128)
    h = _bn_train(h, g1, beta1)

    # ---- fc2 + ReLU + BN2 -----------------------------------------------------
    h = jnp.dot(h, w2, preferred_element_type=jnp.float32) + b2
    h = jnp.maximum(h, 0.0)                                     # (B, 64)
    h = _bn_train(h, g2, beta2)

    # ---- output linear + softmax(dim=-1) --------------------------------------
    logits = jnp.dot(h, w3, preferred_element_type=jnp.float32) + b3
    logits = logits - jnp.max(logits, axis=-1, keepdims=True)
    ex = jnp.exp(logits)
    out_ref[...] = ex / jnp.sum(ex, axis=-1, keepdims=True)     # (B, 5)


def pack_params(p):
    """Pack every weight / bias / BN parameter into ONE (216,128) f32 slab.

    Call once at init (or whenever params change), NOT per forward pass.
    """
    slab = jnp.zeros((_N_ROWS, LANES), jnp.float32)
    slab = slab.at[_ROW_W1:_ROW_W1 + IN_DIM, :H1].set(p["w1"])
    slab = slab.at[_ROW_W2:_ROW_W2 + H1, :H2].set(p["w2"])
    slab = slab.at[_ROW_W3:_ROW_W3 + H2, :POWER_LEVELS].set(p["w3"])
    slab = slab.at[_ROW_VEC + _VEC_B1, :H1].set(p["b1"].reshape(-1))
    slab = slab.at[_ROW_VEC + _VEC_G1, :H1].set(p["g1"].reshape(-1))
    slab = slab.at[_ROW_VEC + _VEC_BETA1, :H1].set(p["beta1"].reshape(-1))
    slab = slab.at[_ROW_VEC + _VEC_B2, :H2].set(p["b2"].reshape(-1))
    slab = slab.at[_ROW_VEC + _VEC_G2, :H2].set(p["g2"].reshape(-1))
    slab = slab.at[_ROW_VEC + _VEC_BETA2, :H2].set(p["beta2"].reshape(-1))
    slab = slab.at[_ROW_VEC + _VEC_B3, :POWER_LEVELS].set(p["b3"].reshape(-1))
    return slab


def network_forward(x, packed_params):
    """x: (B, 16) f32.  packed_params: (216, 128) f32 slab from pack_params().

    BatchNorm needs whole-batch statistics, so batch many agents / timesteps
    along dim 0 and make a single call (the whole batch lives in VMEM; ~1 KB
    of live f32 per row, so thousands of rows fit comfortably on every TPU
    generation without tiling).
    """
    B = x.shape[0]
    vmem = pl.BlockSpec(memory_space=pltpu.MemorySpace.VMEM)
    return pl.pallas_call(
        _network_kernel,
        out_shape=jax.ShapeDtypeStruct((B, POWER_LEVELS), jnp.float32),
        in_specs=[vmem, vmem],
        out_specs=vmem,
    )(x, packed_params)


def init_params(key):
    """Deterministic init.  Linear weights stored as (in, out); bn params (1, C)."""
    ks = jax.random.split(key, 6)

    def lin(kw, kb, fan_in, fan_out):
        bound = 1.0 / jnp.sqrt(fan_in)
        w = jax.random.uniform(kw, (fan_in, fan_out), jnp.float32, -bound, bound)
        b = jax.random.uniform(kb, (1, fan_out), jnp.float32, -bound, bound)
        return w, b

    w1, b1 = lin(ks[0], ks[1], IN_DIM, H1)
    w2, b2 = lin(ks[2], ks[3], H1, H2)
    w3, b3 = lin(ks[4], ks[5], H2, POWER_LEVELS)
    return dict(
        w1=w1, b1=b1, g1=jnp.ones((1, H1), jnp.float32), beta1=jnp.zeros((1, H1), jnp.float32),
        w2=w2, b2=b2, g2=jnp.ones((1, H2), jnp.float32), beta2=jnp.zeros((1, H2), jnp.float32),
        w3=w3, b3=b3,
    )


def network_forward_ref(x, p):
    """Plain-JAX reference mirroring PyTorch training-mode forward."""
    h = jnp.maximum(x @ p["w1"] + p["b1"], 0.0)
    mu, var = jnp.mean(h, 0, keepdims=True), jnp.var(h, 0, keepdims=True)
    h = (h - mu) / jnp.sqrt(var + BN_EPS) * p["g1"] + p["beta1"]
    h = jnp.maximum(h @ p["w2"] + p["b2"], 0.0)
    mu, var = jnp.mean(h, 0, keepdims=True), jnp.var(h, 0, keepdims=True)
    h = (h - mu) / jnp.sqrt(var + BN_EPS) * p["g2"] + p["beta2"]
    return jax.nn.softmax(h @ p["w3"] + p["b3"], axis=-1)


if __name__ == "__main__":
    key = jax.random.PRNGKey(0)
    k_param, k_x = jax.random.split(key)

    B = 8                                     # batch > 1 required by BatchNorm1d training mode
    params = init_params(k_param)
    packed = pack_params(params)              # packed ONCE, outside the per-call path
    packed = jax.block_until_ready(packed)
    x = jax.random.normal(k_x, (B, IN_DIM), jnp.float32)

    out = network_forward(x, packed)
    out = jax.block_until_ready(out)

    ref = network_forward_ref(x, params)
    assert out.shape == (B, POWER_LEVELS)
    assert jnp.allclose(jnp.sum(out, axis=-1), 1.0, atol=1e-5)
    assert jnp.allclose(out, ref, atol=5e-5, rtol=1e-4)

    print("KERNEL_OK")
</pallas_src>

<mosaic_0001>
module attributes {stable_mosaic.version = 11 : i64} {
  func.func @_network_kernel(%arg0: memref<8x16xf32, #tpu.memory_space<vmem>>, %arg1: memref<216x128xf32, #tpu.memory_space<vmem>>, %arg2: memref<8x5xf32, #tpu.memory_space<vmem>>) attributes {dimension_semantics = [], scalar_prefetch = 0 : i64, scratch_operands = 0 : i64, tpu.core_type = #tpu.core_type<tc>} {
    %c0 = arith.constant 0 : index
    %c0_0 = arith.constant 0 : index
    %0 = vector.load %arg0[%c0, %c0_0] : memref<8x16xf32, #tpu.memory_space<vmem>>, vector<8x16xf32>
    %c0_1 = arith.constant 0 : index
    %c0_2 = arith.constant 0 : index
    %1 = vector.load %arg1[%c0_1, %c0_2] : memref<216x128xf32, #tpu.memory_space<vmem>>, vector<16x128xf32>
    %c16 = arith.constant 16 : index
    %c0_3 = arith.constant 0 : index
    %2 = vector.load %arg1[%c16, %c0_3] : memref<216x128xf32, #tpu.memory_space<vmem>>, vector<128x128xf32>
    %3 = vector.extract_strided_slice %2 {offsets = [0, 0], sizes = [128, 64], strides = [1, 1]} : vector<128x128xf32> to vector<128x64xf32>
    %c144 = arith.constant 144 : index
    %c0_4 = arith.constant 0 : index
    %4 = vector.load %arg1[%c144, %c0_4] : memref<216x128xf32, #tpu.memory_space<vmem>>, vector<64x128xf32>
    %5 = vector.extract_strided_slice %4 {offsets = [0, 0], sizes = [64, 5], strides = [1, 1]} : vector<64x128xf32> to vector<64x5xf32>
    %c208 = arith.constant 208 : index
    %c0_5 = arith.constant 0 : index
    %6 = vector.load %arg1[%c208, %c0_5] : memref<216x128xf32, #tpu.memory_space<vmem>>, vector<8x128xf32>
    %7 = vector.extract_strided_slice %6 {offsets = [0, 0], sizes = [1, 128], strides = [1, 1]} : vector<8x128xf32> to vector<1x128xf32>
    %8 = vector.extract_strided_slice %6 {offsets = [1, 0], sizes = [1, 128], strides = [1, 1]} : vector<8x128xf32> to vector<1x128xf32>
    %9 = vector.extract_strided_slice %6 {offsets = [2, 0], sizes = [1, 128], strides = [1, 1]} : vector<8x128xf32> to vector<1x128xf32>
    %10 = vector.extract_strided_slice %6 {offsets = [3, 0], sizes = [1, 64], strides = [1, 1]} : vector<8x128xf32> to vector<1x64xf32>
    %11 = vector.extract_strided_slice %6 {offsets = [4, 0], sizes = [1, 64], strides = [1, 1]} : vector<8x128xf32> to vector<1x64xf32>
    %12 = vector.extract_strided_slice %6 {offsets = [5, 0], sizes = [1, 64], strides = [1, 1]} : vector<8x128xf32> to vector<1x64xf32>
    %13 = vector.extract_strided_slice %6 {offsets = [6, 0], sizes = [1, 5], strides = [1, 1]} : vector<8x128xf32> to vector<1x5xf32>
    %cst = arith.constant dense<0.000000e+00> : vector<8x128xf32>
    %14 = tpu.matmul %0, %1, %cst {dimension_numbers = #tpu.dot_dimension_numbers<[1], [0], [0], [1], [0, 0, 1, 1], [], []>} : vector<8x16xf32>, vector<16x128xf32>, vector<8x128xf32> -> vector<8x128xf32>
    %15 = vector.broadcast %7 : vector<1x128xf32> to vector<8x128xf32>
    %16 = arith.addf %14, %15 : vector<8x128xf32>
    %cst_6 = arith.constant 0.000000e+00 : f32
    %17 = vector.broadcast %cst_6 : f32 to vector<8x128xf32>
    %18 = arith.maximumf %16, %17 : vector<8x128xf32>
    %cst_7 = arith.constant dense<0.000000e+00> : vector<128xf32>
    %19 = vector.multi_reduction <add>, %18, %cst_7 [0] : vector<8x128xf32> to vector<128xf32>
    %20 = vector.shape_cast %19 : vector<128xf32> to vector<1x128xf32>
    %cst_8 = arith.constant 1.250000e-01 : f32
    %21 = vector.broadcast %cst_8 : f32 to vector<1x128xf32>
    %22 = arith.mulf %20, %21 : vector<1x128xf32>
    %23 = vector.broadcast %22 : vector<1x128xf32> to vector<8x128xf32>
    %24 = arith.subf %18, %23 : vector<8x128xf32>
    %25 = arith.mulf %24, %24 : vector<8x128xf32>
    %cst_9 = arith.constant dense<0.000000e+00> : vector<128xf32>
    %26 = vector.multi_reduction <add>, %25, %cst_9 [0] : vector<8x128xf32> to vector<128xf32>
    %27 = vector.shape_cast %26 : vector<128xf32> to vector<1x128xf32>
    %cst_10 = arith.constant 1.250000e-01 : f32
    %28 = vector.broadcast %cst_10 : f32 to vector<1x128xf32>
    %29 = arith.mulf %27, %28 : vector<1x128xf32>
    %cst_11 = arith.constant 9.99999974E-6 : f32
    %30 = vector.broadcast %cst_11 : f32 to vector<1x128xf32>
    %31 = arith.addf %29, %30 : vector<1x128xf32>
    %32 = math.rsqrt %31 : vector<1x128xf32>
    %33 = arith.mulf %8, %32 : vector<1x128xf32>
    %34 = vector.broadcast %33 : vector<1x128xf32> to vector<8x128xf32>
    %35 = arith.mulf %24, %34 : vector<8x128xf32>
    %36 = vector.broadcast %9 : vector<1x128xf32> to vector<8x128xf32>
    %37 = arith.addf %35, %36 : vector<8x128xf32>
    %cst_12 = arith.constant dense<0.000000e+00> : vector<8x64xf32>
    %38 = tpu.matmul %37, %3, %cst_12 {dimension_numbers = #tpu.dot_dimension_numbers<[1], [0], [0], [1], [0, 0, 1, 1], [], []>} : vector<8x128xf32>, vector<128x64xf32>, vector<8x64xf32> -> vector<8x64xf32>
    %39 = vector.broadcast %10 : vector<1x64xf32> to vector<8x64xf32>
    %40 = arith.addf %38, %39 : vector<8x64xf32>
    %cst_13 = arith.constant 0.000000e+00 : f32
    %41 = vector.broadcast %cst_13 : f32 to vector<8x64xf32>
    %42 = arith.maximumf %40, %41 : vector<8x64xf32>
    %cst_14 = arith.constant dense<0.000000e+00> : vector<64xf32>
    %43 = vector.multi_reduction <add>, %42, %cst_14 [0] : vector<8x64xf32> to vector<64xf32>
    %44 = vector.shape_cast %43 : vector<64xf32> to vector<1x64xf32>
    %cst_15 = arith.constant 1.250000e-01 : f32
    %45 = vector.broadcast %cst_15 : f32 to vector<1x64xf32>
    %46 = arith.mulf %44, %45 : vector<1x64xf32>
    %47 = vector.broadcast %46 : vector<1x64xf32> to vector<8x64xf32>
    %48 = arith.subf %42, %47 : vector<8x64xf32>
    %49 = arith.mulf %48, %48 : vector<8x64xf32>
    %cst_16 = arith.constant dense<0.000000e+00> : vector<64xf32>
    %50 = vector.multi_reduction <add>, %49, %cst_16 [0] : vector<8x64xf32> to vector<64xf32>
    %51 = vector.shape_cast %50 : vector<64xf32> to vector<1x64xf32>
    %cst_17 = arith.constant 1.250000e-01 : f32
    %52 = vector.broadcast %cst_17 : f32 to vector<1x64xf32>
    %53 = arith.mulf %51, %52 : vector<1x64xf32>
    %cst_18 = arith.constant 9.99999974E-6 : f32
    %54 = vector.broadcast %cst_18 : f32 to vector<1x64xf32>
    %55 = arith.addf %53, %54 : vector<1x64xf32>
    %56 = math.rsqrt %55 : vector<1x64xf32>
    %57 = arith.mulf %11, %56 : vector<1x64xf32>
    %58 = vector.broadcast %57 : vector<1x64xf32> to vector<8x64xf32>
    %59 = arith.mulf %48, %58 : vector<8x64xf32>
    %60 = vector.broadcast %12 : vector<1x64xf32> to vector<8x64xf32>
    %61 = arith.addf %59, %60 : vector<8x64xf32>
    %cst_19 = arith.constant dense<0.000000e+00> : vector<8x5xf32>
    %62 = tpu.matmul %61, %5, %cst_19 {dimension_numbers = #tpu.dot_dimension_numbers<[1], [0], [0], [1], [0, 0, 1, 1], [], []>} : vector<8x64xf32>, vector<64x5xf32>, vector<8x5xf32> -> vector<8x5xf32>
    %63 = vector.broadcast %13 : vector<1x5xf32> to vector<8x5xf32>
    %64 = arith.addf %62, %63 : vector<8x5xf32>
    %cst_20 = arith.constant dense<0xFF800000> : vector<8xf32>
    %65 = vector.multi_reduction <maximumf>, %64, %cst_20 [1] : vector<8x5xf32> to vector<8xf32>
    %66 = vector.shape_cast %65 : vector<8xf32> to vector<8x1xf32>
    %67 = vector.broadcast %66 : vector<8x1xf32> to vector<8x5xf32>
    %68 = arith.subf %64, %67 : vector<8x5xf32>
    %69 = math.exp %68 : vector<8x5xf32>
    %cst_21 = arith.constant dense<0.000000e+00> : vector<8xf32>
    %70 = vector.multi_reduction <add>, %69, %cst_21 [1] : vector<8x5xf32> to vector<8xf32>
    %71 = vector.shape_cast %70 : vector<8xf32> to vector<8x1xf32>
    %72 = vector.broadcast %71 : vector<8x1xf32> to vector<8x5xf32>
    %73 = arith.divf %69, %72 : vector<8x5xf32>
    %c0_22 = arith.constant 0 : index
    %c0_23 = arith.constant 0 : index
    %74 = vector.load %arg2[%c0_22, %c0_23] : memref<8x5xf32, #tpu.memory_space<vmem>>, vector<8x5xf32>
    tpu.vector_store %arg2[%c0_22, %c0_23], %73 {strides = array<i32>} : memref<8x5xf32, #tpu.memory_space<vmem>>, vector<8x5xf32>,
    return
  }
}

</mosaic_0001>

<llo_original>
// kernel: tpu_custom_call.1
$region0: #{tpu_custom_call.1}
  #allocation0 [shape = 'u32[]', space=smem, size = 0x4, offset = 0x4, fixed_abs, tag = 'smem constant byte address 0x4 - core index']
  #allocation1 [shape = 'u32[144,128]{1,0:T(1,128)}', space=vmem, size = 0x12000, scoped, tag = 'internal scratch']
  %s0 = inlined_call_operand.hbm [shape: f32[8,16], index: 0, kind: input, shape index: {}]
  %s1 = inlined_call_operand.hbm [shape: f32[216,128], index: 1, kind: input, shape index: {}]
  %s2 = inlined_call_operand.hbm [shape: f32[8,5], index: 2, kind: output, shape index: {}]
  %s3 = sld [smem:[#allocation0]]
  $region26: #{tpu_custom_call.1} parent=0
    _
  %s5 = ssub.s32 1, %s3
  %s6 = scalar_select 0, %s5, %s3
  $region1: #{tpu_custom_call.1} parent=0
    #allocation2 [shape = 'u8[4096]{0}', space=vmem, size = 0x1000, scoped, tag = 'input window, operand 0, single buffered']
    #allocation3 [shape = 's32[1]{0}', space=sflag, size = 0x4, scoped, tag = 'scoped memory for tpu_custom_call.1']
    #allocation4 [shape = 's32[1]{0}', space=sflag, size = 0x4, scoped, tag = 'scoped memory for tpu_custom_call.1']
    #allocation5 [shape = 'u8[110592]{0}', space=vmem, size = 0x1b000, scoped, tag = 'input window, operand 1, single buffered']
    #allocation6 [shape = 's32[1]{0}', space=sflag, size = 0x4, scoped, tag = 'scoped memory for tpu_custom_call.1']
    #allocation7 [shape = 'u8[4096]{0}', space=vmem, size = 0x1000, scoped, tag = 'output window, operand 0, single buffered']
    %7 = vsyncpa [#allocation3], 0
    %8 = vsyncpa [#allocation6], 0
    %9 = vsyncpa [#allocation4], 0
    // Predicated region
    $region2: #{tpu_custom_call.1} parent=1 // pred_check
      _
    $region3: #{tpu_custom_call.1} parent=1 // pred_check_branch
      %11 = sbr.rel (0) target = $region5
    $region4: #{tpu_custom_call.1} parent=1 // pred_region
      %s13 = ssub.s32 128, 128
      %14 = vsyncadd [#allocation3], %s13
      %s16 = sshll.u32 [#allocation2], 4
      %s17 = int_to_ptr.vmem [resolvable:$true] %s16
      %19 = dma.hbm_to_vmem [thread:$0]  %s0, 128, %s17, [#allocation3]
    $region5: #{tpu_custom_call.1} parent=1 // pred_fallthru
      _
    // Predicated region
    $region6: #{tpu_custom_call.1} parent=1 // pred_check
      _
    $region7: #{tpu_custom_call.1} parent=1 // pred_check_branch
      %21 = sbr.rel (0) target = $region9
    $region8: #{tpu_custom_call.1} parent=1 // pred_region
      %s23 = ssub.s32 3456, 3456
      %24 = vsyncadd [#allocation6], %s23
      %s25 = sshll.u32 [#allocation5], 4
      %s26 = int_to_ptr.vmem [resolvable:$true] %s25
      %31 = dma.hbm_to_vmem [thread:$0]  %s1, 3456, %s26, [#allocation6], 128, 128, 8
    $region9: #{tpu_custom_call.1} parent=1 // pred_fallthru
      _
    // Predicated region
    $region10: #{tpu_custom_call.1} parent=1 // pred_check
      _
    $region11: #{tpu_custom_call.1} parent=1 // pred_check_branch
      %33 = sbr.rel (0) target = $region13
    $region12: #{tpu_custom_call.1} parent=1 // pred_region
      %34 = dma.done [#allocation3], 128
    $region13: #{tpu_custom_call.1} parent=1 // pred_fallthru
      _
    // Predicated region
    $region14: #{tpu_custom_call.1} parent=1 // pred_check
      _
    $region15: #{tpu_custom_call.1} parent=1 // pred_check_branch
      %36 = sbr.rel (0) target = $region17
    $region16: #{tpu_custom_call.1} parent=1 // pred_region
      %37 = dma.done [#allocation6], 3456
    $region17: #{tpu_custom_call.1} parent=1 // pred_fallthru
      _
    %v38 = vld [vmem:[#allocation2] sm:$0xff]
    %v39 = vld [vmem:[#allocation5] sm:$0xff]
    %v40 = vld [vmem:[#allocation5 + $0x8] sm:$0xff]
    %v41 = vld [vmem:[#allocation5 + $0x10] sm:$0xff]
    %v42 = vld [vmem:[#allocation5 + $0x18] sm:$0xff]
    %v43 = vld [vmem:[#allocation5 + $0x20] sm:$0xff]
    %v44 = vld [vmem:[#allocation5 + $0x28] sm:$0xff]
    %v45 = vld [vmem:[#allocation5 + $0x30] sm:$0xff]
    %v46 = vld [vmem:[#allocation5 + $0x38] sm:$0xff]
    %v47 = vld [vmem:[#allocation5 + $0x40] sm:$0xff]
    %v48 = vld [vmem:[#allocation5 + $0x48] sm:$0xff]
    %v49 = vld [vmem:[#allocation5 + $0x50] sm:$0xff]
    %v50 = vld [vmem:[#allocation5 + $0x58] sm:$0xff]
    %v51 = vld [vmem:[#allocation5 + $0x60] sm:$0xff]
    %v52 = vld [vmem:[#allocation5 + $0x68] sm:$0xff]
    %v53 = vld [vmem:[#allocation5 + $0x70] sm:$0xff]
    %v54 = vld [vmem:[#allocation5 + $0x78] sm:$0xff]
    %v55 = vld [vmem:[#allocation5 + $0x80] sm:$0xff]
    %v56 = vld [vmem:[#allocation5 + $0x88] sm:$0xff]
    %v57 = vld [vmem:[#allocation5 + $0x90] sm:$0xff]
    %v58 = vld [vmem:[#allocation5 + $0x98] sm:$0xff]
    %v59 = vld [vmem:[#allocation5 + $0xa0] sm:$0xff]
    %v60 = vld [vmem:[#allocation5 + $0xa8] sm:$0xff]
    %v61 = vld [vmem:[#allocation5 + $0xb0] sm:$0xff]
    %v62 = vld [vmem:[#allocation5 + $0xb8] sm:$0xff]
    %v63 = vld [vmem:[#allocation5 + $0xc0] sm:$0xff]
    %v64 = vld [vmem:[#allocation5 + $0xc8] sm:$0xff]
    %v65 = vld [vmem:[#allocation5 + $0xd0] sm:$0xff]
    %v66 = vlaneseq
    %v67 = vshrl.u32 %v66, 7
    %v68 = vsub.s32 0, %v67
    %v69 = vrot.slane %v65, %v68
    %vm70 = vcmask 130048
    %v72 = vsel %vm70, %v38, 0
    %74 = vmatprep.subr.mxu0 0.0
    %75 = vmatpush1.msra.mxu0 %v39
    %76 = vmatprep.subr.mxu0 0.0
    %77 = vmatpush1.msra.mxu0 %v40
    %78 = vmatprep.subr.mxu0 0.0
    %79 = vmatpush1.msra.mxu0 0.0
    %80 = vmatprep.subr.mxu0 0.0
    %81 = vmatpush1.msra.mxu0 0.0
    %82 = vmatprep.subr.mxu0 0.0
    %83 = vmatpush1.msra.mxu0 0.0
    %84 = vmatprep.subr.mxu0 0.0
    %85 = vmatpush1.msra.mxu0 0.0
    %86 = vmatprep.subr.mxu0 0.0
    %87 = vmatpush1.msra.mxu0 0.0
    %88 = vmatprep.subr.mxu0 0.0
    %89 = vmatpush1.msra.mxu0 0.0
    %90 = vmatprep.subr.mxu0 0.0
    %91 = vmatpush1.msra.mxu0 0.0
    %92 = vmatprep.subr.mxu0 0.0
    %93 = vmatpush1.msra.mxu0 0.0
    %94 = vmatprep.subr.mxu0 0.0
    %95 = vmatpush1.msra.mxu0 0.0
    %96 = vmatprep.subr.mxu0 0.0
    %97 = vmatpush1.msra.mxu0 0.0
    %98 = vmatprep.subr.mxu0 0.0
    %99 = vmatpush1.msra.mxu0 0.0
    %100 = vmatprep.subr.mxu0 0.0
    %101 = vmatpush1.msra.mxu0 0.0
    %102 = vmatprep.subr.mxu0 0.0
    %103 = vmatpush1.msra.mxu0 0.0
    %104 = vmatprep.subr.mxu0 0.0
    %105 = vmatpush1.msra.mxu0 0.0
    %106 = vmatprep.subr.mxu0 0.0
    %107 = vmatpush1.msra.mxu0 0.0
    %108 = vmatprep.subr.mxu0 0.0
    %109 = vmatpush1.msra.mxu0 0.0
    %110 = vmatprep.subr.mxu0 0.0
    %111 = vmatpush1.msra.mxu0 0.0
    %112 = vmatprep.subr.mxu0 0.0
    %113 = vmatpush1.msra.mxu0 0.0
    %114 = vmatprep.subr.mxu0 0.0
    %115 = vmatpush1.msra.mxu0 0.0
    %116 = vmatprep.subr.mxu0 0.0
    %117 = vmatpush1.msra.mxu0 0.0
    %118 = vmatprep.subr.mxu0 0.0
    %119 = vmatpush1.msra.mxu0 0.0
    %120 = vmatprep.subr.mxu0 0.0
    %121 = vmatpush1.msra.mxu0 0.0
    %122 = vmatprep.subr.mxu0 0.0
    %123 = vmatpush1.msra.mxu0 0.0
    %124 = vmatprep.subr.mxu0 0.0
    %125 = vmatpush1.msra.mxu0 0.0
    %126 = vmatprep.subr.mxu0 0.0
    %127 = vmatpush1.msra.mxu0 0.0
    %128 = vmatprep.subr.mxu0 0.0
    %129 = vmatpush1.msra.mxu0 0.0
    %130 = vmatprep.subr.mxu0 0.0
    %131 = vmatpush1.msra.mxu0 0.0
    %132 = vmatprep.subr.mxu0 0.0
    %133 = vmatpush1.msra.mxu0 0.0
    %134 = vmatprep.subr.mxu0 0.0
    %135 = vmatpush1.msra.mxu0 0.0
    %136 = vmatprep.subr.mxu0 0.0
    %137 = vmatpush1.msra.mxu0 0.0
    %138 = vmatprep.mubr.f32.mxu0 0.0
    %139 = vmatmul.mubr.f32.gmra.mrb[0].mxu0 %v72
    %v140 = vpop.f32.mrb[0].mxu0
    %v141 = vadd.f32 %v69, %v140
    %v142 = vpop.f32.mrb[0].mxu0
    %143 = vdwg.mxu0
    %v144 = vmax.f32 %v141, 0.0
    %v145 = vrot.slane %v144, 4
    %v146 = vadd.f32 %v144, %v145
    %v147 = vrot.slane %v146, 2
    %v148 = vadd.f32 %v146, %v147
    %v149 = vrot.slane %v148, 1
    %v150 = vadd.f32 %v148, %v149
    %v151 = vmul.f32 %v150, 0.125
    %v152 = vsub.f32 %v144, %v151
    %v153 = vmul.f32 %v152, %v152
    %v154 = vrot.slane %v153, 4
    %v155 = vadd.f32 %v153, %v154
    %v156 = vrot.slane %v155, 2
    %v157 = vadd.f32 %v155, %v156
    %v158 = vrot.slane %v157, 1
    %v159 = vadd.f32 %v157, %v158
    %v160 = vmul.f32 %v159, 0.125
    %v161 = vadd.f32 %v160, 1e-05
    %v162 = vrsqrt.pop %v161
    %v163 = vmul.f32 %v65, %v162
    %v164 = vlaneseq
    %v165 = vshrl.u32 %v164, 7
    %v166 = vsub.s32 1, %v165
    %v167 = vrot.slane %v163, %v166
    %v168 = vmul.f32 %v152, %v167
    %v169 = vlaneseq
    %v170 = vshrl.u32 %v169, 7
    %v171 = vsub.s32 2, %v170
    %v172 = vrot.slane %v65, %v171
    %v173 = vadd.f32 %v168, %v172
    %v174 = vlaneseq
    %v175 = vshrl.u32 %v174, 7
    %v176 = vsub.s32 3, %v175
    %v177 = vrot.slane %v65, %v176
    %178 = vmatprep.subr.mxu0 0.0
    %179 = vmatpush1.msra.mxu0 %v41
    %180 = vmatprep.subr.mxu0 0.0
    %181 = vmatpush1.msra.mxu0 %v42
    %182 = vmatprep.subr.mxu0 0.0
    %183 = vmatpush1.msra.mxu0 %v43
    %184 = vmatprep.subr.mxu0 0.0
    %185 = vmatpush1.msra.mxu0 %v44
    %186 = vmatprep.subr.mxu0 0.0
    %187 = vmatpush1.msra.mxu0 %v45
    %188 = vmatprep.subr.mxu0 0.0
    %189 = vmatpush1.msra.mxu0 %v46
    %190 = vmatprep.subr.mxu0 0.0
    %191 = vmatpush1.msra.mxu0 %v47
    %192 = vmatprep.subr.mxu0 0.0
    %193 = vmatpush1.msra.mxu0 %v48
    %194 = vmatprep.subr.mxu0 0.0
    %195 = vmatpush1.msra.mxu0 %v49
    %196 = vmatprep.subr.mxu0 0.0
    %197 = vmatpush1.msra.mxu0 %v50
    %198 = vmatprep.subr.mxu0 0.0
    %199 = vmatpush1.msra.mxu0 %v51
    %200 = vmatprep.subr.mxu0 0.0
    %201 = vmatpush1.msra.mxu0 %v52
    %202 = vmatprep.subr.mxu0 0.0
    %203 = vmatpush1.msra.mxu0 %v53
    %204 = vmatprep.subr.mxu0 0.0
    %205 = vmatpush1.msra.mxu0 %v54
    %206 = vmatprep.subr.mxu0 0.0
    %207 = vmatpush1.msra.mxu0 %v55
    %208 = vmatprep.subr.mxu0 0.0
    %209 = vmatpush1.msra.mxu0 %v56
    %210 = vmatprep.subr.mxu0 0.0
    %211 = vmatpush1.msra.mxu0 0.0
    %212 = vmatprep.subr.mxu0 0.0
    %213 = vmatpush1.msra.mxu0 0.0
    %214 = vmatprep.subr.mxu0 0.0
    %215 = vmatpush1.msra.mxu0 0.0
    %216 = vmatprep.subr.mxu0 0.0
    %217 = vmatpush1.msra.mxu0 0.0
    %218 = vmatprep.subr.mxu0 0.0
    %219 = vmatpush1.msra.mxu0 0.0
    %220 = vmatprep.subr.mxu0 0.0
    %221 = vmatpush1.msra.mxu0 0.0
    %222 = vmatprep.subr.mxu0 0.0
    %223 = vmatpush1.msra.mxu0 0.0
    %224 = vmatprep.subr.mxu0 0.0
    %225 = vmatpush1.msra.mxu0 0.0
    %226 = vmatprep.subr.mxu0 0.0
    %227 = vmatpush1.msra.mxu0 0.0
    %228 = vmatprep.subr.mxu0 0.0
    %229 = vmatpush1.msra.mxu0 0.0
    %230 = vmatprep.subr.mxu0 0.0
    %231 = vmatpush1.msra.mxu0 0.0
    %232 = vmatprep.subr.mxu0 0.0
    %233 = vmatpush1.msra.mxu0 0.0
    %234 = vmatprep.subr.mxu0 0.0
    %235 = vmatpush1.msra.mxu0 0.0
    %236 = vmatprep.subr.mxu0 0.0
    %237 = vmatpush1.msra.mxu0 0.0
    %238 = vmatprep.subr.mxu0 0.0
    %239 = vmatpush1.msra.mxu0 0.0
    %240 = vmatprep.subr.mxu0 0.0
    %241 = vmatpush1.msra.mxu0 0.0
    %242 = vmatprep.mubr.f32.mxu0 0.0
    %243 = vmatmul.mubr.f32.gmra.mrb[0].mxu0 %v173
    %v244 = vpop.f32.mrb[0].mxu0
    %v245 = vadd.f32 %v177, %v244
    %v246 = vpop.f32.mrb[0].mxu0
    %247 = vdwg.mxu0
    %v248 = vmax.f32 %v245, 0.0
    %vm249 = vcmask 523264
    %v250 = vsel %vm249, %v248, 0.0
    %v251 = vrot.slane %v250, 4
    %v252 = vadd.f32 %v250, %v251
    %v253 = vrot.slane %v252, 2
    %v254 = vadd.f32 %v252, %v253
    %v255 = vrot.slane %v254, 1
    %v256 = vadd.f32 %v254, %v255
    %v257 = vmul.f32 %v256, 0.125
    %v258 = vsub.f32 %v248, %v257
    %v259 = vmul.f32 %v258, %v258
    %v260 = vsel %vm249, %v259, 0.0
    %v261 = vrot.slane %v260, 4
    %v262 = vadd.f32 %v260, %v261
    %v263 = vrot.slane %v262, 2
    %v264 = vadd.f32 %v262, %v263
    %v265 = vrot.slane %v264, 1
    %v266 = vadd.f32 %v264, %v265
    %v267 = vmul.f32 %v266, 0.125
    %v268 = vadd.f32 %v267, 1e-05
    %v269 = vrsqrt.pop %v268
    %v270 = vmul.f32 %v65, %v269
    %v271 = vlaneseq
    %v272 = vshrl.u32 %v271, 7
    %v273 = vsub.s32 4, %v272
    %v274 = vrot.slane %v270, %v273
    %v275 = vmul.f32 %v258, %v274
    %v276 = vlaneseq
    %v277 = vshrl.u32 %v276, 7
    %v278 = vsub.s32 5, %v277
    %v279 = vrot.slane %v65, %v278
    %v280 = vadd.f32 %v275, %v279
    %v281 = vlaneseq
    %v282 = vshrl.u32 %v281, 7
    %v283 = vsub.s32 6, %v282
    %v284 = vrot.slane %v65, %v283
    %v286 = vsel %vm249, %v280, 0
    %288 = vmatprep.subr.mxu0 0.0
    %289 = vmatpush1.msra.mxu0 %v57
    %290 = vmatprep.subr.mxu0 0.0
    %291 = vmatpush1.msra.mxu0 %v58
    %292 = vmatprep.subr.mxu0 0.0
    %293 = vmatpush1.msra.mxu0 %v59
    %294 = vmatprep.subr.mxu0 0.0
    %295 = vmatpush1.msra.mxu0 %v60
    %296 = vmatprep.subr.mxu0 0.0
    %297 = vmatpush1.msra.mxu0 %v61
    %298 = vmatprep.subr.mxu0 0.0
    %299 = vmatpush1.msra.mxu0 %v62
    %300 = vmatprep.subr.mxu0 0.0
    %301 = vmatpush1.msra.mxu0 %v63
    %302 = vmatprep.subr.mxu0 0.0
    %303 = vmatpush1.msra.mxu0 %v64
    %304 = vmatprep.subr.mxu0 0.0
    %305 = vmatpush1.msra.mxu0 0.0
    %306 = vmatprep.subr.mxu0 0.0
    %307 = vmatpush1.msra.mxu0 0.0
    %308 = vmatprep.subr.mxu0 0.0
    %309 = vmatpush1.msra.mxu0 0.0
    %310 = vmatprep.subr.mxu0 0.0
    %311 = vmatpush1.msra.mxu0 0.0
    %312 = vmatprep.subr.mxu0 0.0
    %313 = vmatpush1.msra.mxu0 0.0
    %314 = vmatprep.subr.mxu0 0.0
    %315 = vmatpush1.msra.mxu0 0.0
    %316 = vmatprep.subr.mxu0 0.0
    %317 = vmatpush1.msra.mxu0 0.0
    %318 = vmatprep.subr.mxu0 0.0
    %319 = vmatpush1.msra.mxu0 0.0
    %320 = vmatprep.subr.mxu0 0.0
    %321 = vmatpush1.msra.mxu0 0.0
    %322 = vmatprep.subr.mxu0 0.0
    %323 = vmatpush1.msra.mxu0 0.0
    %324 = vmatprep.subr.mxu0 0.0
    %325 = vmatpush1.msra.mxu0 0.0
    %326 = vmatprep.subr.mxu0 0.0
    %327 = vmatpush1.msra.mxu0 0.0
    %328 = vmatprep.subr.mxu0 0.0
    %329 = vmatpush1.msra.mxu0 0.0
    %330 = vmatprep.subr.mxu0 0.0
    %331 = vmatpush1.msra.mxu0 0.0
    %332 = vmatprep.subr.mxu0 0.0
    %333 = vmatpush1.msra.mxu0 0.0
    %334 = vmatprep.subr.mxu0 0.0
    %335 = vmatpush1.msra.mxu0 0.0
    %336 = vmatprep.subr.mxu0 0.0
    %337 = vmatpush1.msra.mxu0 0.0
    %338 = vmatprep.subr.mxu0 0.0
    %339 = vmatpush1.msra.mxu0 0.0
    %340 = vmatprep.subr.mxu0 0.0
    %341 = vmatpush1.msra.mxu0 0.0
    %342 = vmatprep.subr.mxu0 0.0
    %343 = vmatpush1.msra.mxu0 0.0
    %344 = vmatprep.subr.mxu0 0.0
    %345 = vmatpush1.msra.mxu0 0.0
    %346 = vmatprep.subr.mxu0 0.0
    %347 = vmatpush1.msra.mxu0 0.0
    %348 = vmatprep.subr.mxu0 0.0
    %349 = vmatpush1.msra.mxu0 0.0
    %350 = vmatprep.subr.mxu0 0.0
    %351 = vmatpush1.msra.mxu0 0.0
    %352 = vmatprep.mubr.f32.mxu0 0.0
    %353 = vmatmul.mubr.f32.gmra.mrb[0].mxu0 %v286
    %v354 = vpop.f32.mrb[0].mxu0
    %v355 = vadd.f32 %v284, %v354
    %v356 = vpop.f32.mrb[0].mxu0
    %357 = vdwg.mxu0
    %vm358 = vcmask 39936
    %v359 = vsel %vm358, %v355, -inf
    %360 = vmax.xlane.f32.xlu0 %v359
    %v361 = vpop.xlane.xlu0 %360
    %v362 = vsub.f32 %v355, %v361
    %v363 = vmul.f32 %v362, 1.442695
    %v364 = vpow.pop %v363
    %v365 = vsel %vm358, %v364, 0.0
    %366 = vadd.xlane.f32.xlu0 %v365
    %v367 = vpop.xlane.xlu0 %366
    %v368 = vrcp.pop %v367
    %v369 = vmul.f32 %v364, %v368
    %370 = vst.msk [vmem:[#allocation7] sm:$0xff] %vm358, %v369
    // Predicated region
    $region18: #{tpu_custom_call.1} parent=1 // pred_check
      _
    $region19: #{tpu_custom_call.1} parent=1 // pred_check_branch
      %372 = sbr.rel (0) target = $region21
    $region20: #{tpu_custom_call.1} parent=1 // pred_region
      %s374 = ssub.s32 128, 128
      %375 = vsyncadd [#allocation4], %s374
      %s377 = sshll.u32 [#allocation7], 4
      %s378 = int_to_ptr.vmem [resolvable:$true] %s377
      %380 = dma.vmem_to_hbm [thread:$0]  %s378, 128, %s2, [#allocation4]
    $region21: #{tpu_custom_call.1} parent=1 // pred_fallthru
      _
    // Predicated region
    $region22: #{tpu_custom_call.1} parent=1 // pred_check
      _
    $region23: #{tpu_custom_call.1} parent=1 // pred_check_branch
      %382 = sbr.rel (0) target = $region25
    $region24: #{tpu_custom_call.1} parent=1 // pred_region
      %383 = dma.done [#allocation4], 128
    $region25: #{tpu_custom_call.1} parent=1 // pred_fallthru
      _
    %384 = vsyncpa [#allocation3], 1
    %385 = vsyncpa [#allocation6], 1
    %386 = vsyncpa [#allocation4], 1

</llo_original>
